<compile_context>
chip_gen: v5e
topology: v5e:2x2
jax: 0.10.0
libtpu: 0.0.40
codegen_flags: <defaults>
</compile_context>

<pallas_src>
import math
import functools

import jax
import jax.numpy as jnp
from jax.experimental import pallas as pl
from jax.experimental.pallas import tpu as pltpu


NEG_SLOPE = 0.2


def _leaky_relu(x, slope):
    # max(x, slope*x) == LeakyReLU(x) for 0 <= slope <= 1 (no compare/select).
    return jnp.maximum(x, slope * x)


def _round_up(x, m):
    return (x + m - 1) // m * m


# ---------------------------------------------------------------------------
# Fused multi-layer GAT kernel (one grid step per layer).
# ---------------------------------------------------------------------------
def fused_gat_kernel(h0_ref, adj_ref, w_ref, bias_ref, out_ref, abias_ref,
                     *, d_pad, negative_slope):
    """One GAT layer per grid step; node features carried in the resident out_ref.

    h0_ref   : (N, D)        padded input features (consumed only at layer 0)
    adj_ref  : (N, N)  int8  adjacency, adj[i, j] != 0 iff edge j -> i
    w_ref    : (D, D+128)    layer-l augmented weights [W1 | v_dst | v_src | 0...]
    bias_ref : (1, D)        layer-l bias (zero-padded)
    out_ref  : (N, D)        output; constant block index => VMEM-resident carrier
    abias_ref: (N, N)  f32   scratch: additive mask bias (0 edge / -1e30 non-edge)
    """
    layer = pl.program_id(0)

    # Layer 0: initialise the feature carrier and hoist the adjacency ->
    # additive-bias conversion out of the per-layer path (adj is constant).
    @pl.when(layer == 0)
    def _():
        out_ref[...] = h0_ref[...]
        adj_f = adj_ref[...].astype(jnp.float32)
        abias_ref[...] = jnp.where(adj_f > 0.0, 0.0, -1e30)

    h = out_ref[...]                                                  # (N, D)

    # Single MXU pass per layer: ha = h @ [W1 | v_dst | v_src] (lane-dense).
    ha = jnp.dot(h, w_ref[...], preferred_element_type=jnp.float32)   # (N, D+128)
    h_trans = ha[:, :d_pad]                                           # (N, D)
    s_dst = ha[:, d_pad:d_pad + 1]                                    # (N, 1)
    s_src = ha[:, d_pad + 1:d_pad + 2]                                # (N, 1)

    # e[i, j] = LeakyReLU(s_src[j] + s_dst[i]) + mask_bias[i, j]
    e = _leaky_relu(s_dst + jnp.transpose(s_src), negative_slope) + abias_ref[...]

    # Masked softmax over incoming (src) neighbours; non-edges underflow to 0.
    e_max = jnp.max(e, axis=1, keepdims=True)
    p = jnp.exp(e - e_max)                                            # (N, N)
    inv_denom = 1.0 / jnp.sum(p, axis=1, keepdims=True)               # (N, 1), >= 1

    # Aggregate un-normalised messages on the MXU, then fold 1/denom row-wise.
    agg = jnp.dot(p, h_trans, preferred_element_type=jnp.float32)     # (N, D)
    out_ref[...] = _leaky_relu(agg * inv_denom + bias_ref[...], negative_slope)


# ---------------------------------------------------------------------------
# Wrapper: pad, fold attention vectors into W_aug, stack layers, one pallas_call.
# ---------------------------------------------------------------------------
def intra_channel_forward(params, adj, h, negative_slope=NEG_SLOPE):
    """Forward pass of IntraChannel (stacked GAT layers) as one fused kernel."""
    N, in_dim = h.shape
    hidden_dim = params[0]["w1"].shape[1]
    L = len(params)

    d_pad = _round_up(max(in_dim, hidden_dim), 128)   # lane-dense feature dim
    d_aug = d_pad + 128                               # extra tile for [v_dst|v_src]
    n_pad = _round_up(N, 128)                         # both node axes lane-dense

    # Zero padding keeps the math exact: padded weight rows/cols are zero and
    # padded src columns are masked off by the -1e30 adjacency bias.
    h0 = jnp.zeros((n_pad, d_pad), jnp.float32).at[:N, :in_dim].set(
        h.astype(jnp.float32))
    adj_i8 = jnp.zeros((n_pad, n_pad), jnp.int8).at[:N, :N].set(
        adj.astype(jnp.int8))

    # Stack per-layer parameters; fold attention vectors into the W_aug block:
    #   column d_pad   = W2 @ attn_dst^T,   column d_pad+1 = W2 @ attn_src^T.
    w_stack = jnp.zeros((L, d_pad, d_aug), jnp.float32)
    bias_stack = jnp.zeros((L, 1, d_pad), jnp.float32)
    for l, p in enumerate(params):
        di, do = p["w1"].shape
        w_stack = w_stack.at[l, :di, :do].set(p["w1"])
        w_stack = w_stack.at[l, :di, d_pad].set((p["w2"] @ p["attn_dst"].T)[:, 0])
        w_stack = w_stack.at[l, :di, d_pad + 1].set((p["w2"] @ p["attn_src"].T)[:, 0])
        bias_stack = bias_stack.at[l, :, :do].set(p["bias"])

    kernel = functools.partial(fused_gat_kernel, d_pad=d_pad,
                               negative_slope=negative_slope)

    out = pl.pallas_call(
        kernel,
        out_shape=jax.ShapeDtypeStruct((n_pad, d_pad), jnp.float32),
        grid_spec=pltpu.PrefetchScalarGridSpec(
            num_scalar_prefetch=0,
            grid=(L,),
            in_specs=[
                pl.BlockSpec((n_pad, d_pad), lambda l: (0, 0)),            # h0
                pl.BlockSpec((n_pad, n_pad), lambda l: (0, 0)),            # adj (i8)
                pl.BlockSpec((None, d_pad, d_aug), lambda l: (l, 0, 0)),   # W_aug[l]
                pl.BlockSpec((None, 1, d_pad), lambda l: (l, 0, 0)),       # bias[l]
            ],
            out_specs=pl.BlockSpec((n_pad, d_pad), lambda l: (0, 0)),
            scratch_shapes=[pltpu.VMEM((n_pad, n_pad), jnp.float32)],      # mask bias
        ),
        compiler_params=pltpu.CompilerParams(
            dimension_semantics=("arbitrary",),   # layers are sequential
        ),
    )(h0, adj_i8, w_stack, bias_stack)

    return out[:N, :hidden_dim]


# ---------------------------------------------------------------------------
# Parameter construction (deterministic, mimics the PyTorch init shapes).
# ---------------------------------------------------------------------------
def _xavier_normal(key, fan_in, fan_out, shape):
    std = math.sqrt(2.0 / (fan_in + fan_out))
    return std * jax.random.normal(key, shape, dtype=jnp.float32)


def init_gat_layer(key, in_dim, out_dim):
    k1, k2, k3, k4 = jax.random.split(key, 4)
    # nn.Linear(in_dim, out_dim).weight is (out_dim, in_dim); we store the
    # transpose (in_dim, out_dim) so the kernel computes x @ W.
    w1 = _xavier_normal(k1, in_dim, out_dim, (in_dim, out_dim))
    w2 = _xavier_normal(k2, in_dim, out_dim, (in_dim, out_dim))
    # W3 exists in the module but is unused in forward (kept out of the kernel).
    _w3 = _xavier_normal(k3, in_dim, out_dim, (in_dim, out_dim))
    # attn is a (2*out_dim,) vector, xavier-initialised as a (1, 2*out_dim) mat.
    attn = _xavier_normal(k4, 2 * out_dim, 1, (1, 2 * out_dim))
    return {
        "w1": w1,
        "w2": w2,
        "attn_src": attn[:, :out_dim],        # (1, out_dim)
        "attn_dst": attn[:, out_dim:],        # (1, out_dim)
        "bias": jnp.zeros((1, out_dim), jnp.float32),
    }


def init_protein_residue_channel(key, num_layers, in_dim, hidden_dim):
    keys = jax.random.split(key, num_layers)
    params = [init_gat_layer(keys[0], in_dim, hidden_dim)]
    for i in range(1, num_layers):
        params.append(init_gat_layer(keys[i], hidden_dim, hidden_dim))
    return params


# ---------------------------------------------------------------------------
# Pure-JAX reference (unfolded math, no Pallas) for a correctness check.
# ---------------------------------------------------------------------------
def _ref_layer(h, adj, p, slope):
    def lrelu(x):
        return jnp.where(x > 0, x, slope * x)
    h_trans = h @ p["w1"]
    h_att = h @ p["w2"]
    s_src = jnp.sum(h_att * p["attn_src"], axis=1)
    s_dst = jnp.sum(h_att * p["attn_dst"], axis=1)
    e = lrelu(s_dst[:, None] + s_src[None, :])
    mask = adj > 0
    e = jnp.where(mask, e, -1e30)
    p_exp = jnp.where(mask, jnp.exp(e - e.max(axis=1, keepdims=True)), 0.0)
    denom = p_exp.sum(axis=1, keepdims=True)
    a = p_exp / jnp.where(denom > 0, denom, 1.0)
    return lrelu(a @ h_trans + p["bias"])


def _ref_forward(params, adj, h, slope):
    for p in params:
        h = _ref_layer(h, adj, p, slope)
    return h


if __name__ == "__main__":
    num_layers = 3
    in_dim = 32
    hidden_dim = 32
    N = 8  # number of graph nodes (protein residues)

    root = jax.random.PRNGKey(0)
    k_param, k_h, k_adj = jax.random.split(root, 3)

    params = init_protein_residue_channel(k_param, num_layers, in_dim, hidden_dim)

    # node features
    h = jax.random.normal(k_h, (N, in_dim), dtype=jnp.float32)

    # random directed graph with self-loops; adj[i, j] = 1 iff edge j -> i
    adj = (jax.random.uniform(k_adj, (N, N)) < 0.4).astype(jnp.int8)
    adj = jnp.maximum(adj, jnp.eye(N, dtype=jnp.int8))

    out = intra_channel_forward(params, adj, h)
    out = jax.block_until_ready(out)

    ref = _ref_forward(params, adj, h, NEG_SLOPE)
    assert out.shape == (N, hidden_dim)
    assert jnp.allclose(out, ref, rtol=1e-4, atol=1e-4), "mismatch vs reference"

    print("KERNEL_OK")
</pallas_src>

<mosaic_0001>
module attributes {stable_mosaic.version = 11 : i64} {
  func.func @fused_gat_kernel(%arg0: i32, %arg1: memref<128x128xf32, #tpu.memory_space<vmem>>, %arg2: memref<128x128xi8, #tpu.memory_space<vmem>>, %arg3: memref<1x128x256xf32, #tpu.memory_space<vmem>>, %arg4: memref<1x1x128xf32, #tpu.memory_space<vmem>>, %arg5: memref<128x128xf32, #tpu.memory_space<vmem>>, %arg6: memref<128x128xf32, #tpu.memory_space<vmem>>) attributes {dimension_semantics = [#tpu.dimension_semantics<arbitrary>], iteration_bounds = array<i64: 3>, scalar_prefetch = 0 : i64, scratch_operands = 1 : i64, tpu.core_type = #tpu.core_type<tc>, window_params = [{pipeline_mode = #tpu.pipeline_mode<synchronous>, transform_indices = @transform_0, window_bounds = array<i64: 128, 128>}, {pipeline_mode = #tpu.pipeline_mode<synchronous>, transform_indices = @transform_1, window_bounds = array<i64: 128, 128>}, {transform_indices = @transform_2, window_bounds = array<i64: 1, 128, 256>}, {transform_indices = @transform_3, window_bounds = array<i64: 1, 1, 128>}, {pipeline_mode = #tpu.pipeline_mode<synchronous>, transform_indices = @transform_4, window_bounds = array<i64: 128, 128>}]} {
    %c0_i32 = arith.constant 0 : i32
    %0 = arith.cmpi eq, %arg0, %c0_i32 : i32
    %1 = arith.extui %0 : i1 to i32
    %c0_i32_0 = arith.constant 0 : i32
    %2 = arith.cmpi ne, %1, %c0_i32_0 : i32
    scf.if %2 {
      %c0_18 = arith.constant 0 : index
      %c0_19 = arith.constant 0 : index
      %39 = vector.load %arg1[%c0_18, %c0_19] : memref<128x128xf32, #tpu.memory_space<vmem>>, vector<128x128xf32>
      %c0_20 = arith.constant 0 : index
      %c0_21 = arith.constant 0 : index
      %40 = vector.load %arg5[%c0_20, %c0_21] : memref<128x128xf32, #tpu.memory_space<vmem>>, vector<128x128xf32>
      tpu.vector_store %arg5[%c0_20, %c0_21], %39 {strides = array<i32>} : memref<128x128xf32, #tpu.memory_space<vmem>>, vector<128x128xf32>,
      %c0_22 = arith.constant 0 : index
      %c0_23 = arith.constant 0 : index
      %41 = vector.load %arg2[%c0_22, %c0_23] : memref<128x128xi8, #tpu.memory_space<vmem>>, vector<128x128xi8>
      %42 = arith.sitofp %41 : vector<128x128xi8> to vector<128x128xf32>
      %cst_24 = arith.constant 0.000000e+00 : f32
      %43 = vector.broadcast %cst_24 : f32 to vector<128x128xf32>
      %44 = arith.cmpf ogt, %42, %43 : vector<128x128xf32>
      %cst_25 = arith.constant 0.000000e+00 : f32
      %cst_26 = arith.constant -1.000000e+30 : f32
      %45 = vector.broadcast %cst_25 : f32 to vector<128x128xf32>
      %46 = vector.broadcast %cst_26 : f32 to vector<128x128xf32>
      %47 = arith.select %44, %45, %46 : vector<128x128xi1>, vector<128x128xf32>
      %c0_27 = arith.constant 0 : index
      %c0_28 = arith.constant 0 : index
      %48 = vector.load %arg6[%c0_27, %c0_28] : memref<128x128xf32, #tpu.memory_space<vmem>>, vector<128x128xf32>
      tpu.vector_store %arg6[%c0_27, %c0_28], %47 {strides = array<i32>} : memref<128x128xf32, #tpu.memory_space<vmem>>, vector<128x128xf32>,
    } else {
    }
    %c0 = arith.constant 0 : index
    %c0_1 = arith.constant 0 : index
    %3 = vector.load %arg5[%c0, %c0_1] : memref<128x128xf32, #tpu.memory_space<vmem>>, vector<128x128xf32>
    %c0_2 = arith.constant 0 : index
    %c0_3 = arith.constant 0 : index
    %c0_4 = arith.constant 0 : index
    %4 = vector.load %arg3[%c0_2, %c0_3, %c0_4] : memref<1x128x256xf32, #tpu.memory_space<vmem>>, vector<1x128x256xf32>
    %5 = vector.shape_cast %4 : vector<1x128x256xf32> to vector<128x256xf32>
    %cst = arith.constant dense<0.000000e+00> : vector<128x256xf32>
    %6 = tpu.matmul %3, %5, %cst {dimension_numbers = #tpu.dot_dimension_numbers<[1], [0], [0], [1], [0, 0, 1, 1], [], []>} : vector<128x128xf32>, vector<128x256xf32>, vector<128x256xf32> -> vector<128x256xf32>
    %7 = vector.extract_strided_slice %6 {offsets = [0, 0], sizes = [128, 128], strides = [1, 1]} : vector<128x256xf32> to vector<128x128xf32>
    %8 = vector.extract_strided_slice %6 {offsets = [0, 128], sizes = [128, 1], strides = [1, 1]} : vector<128x256xf32> to vector<128x1xf32>
    %9 = vector.extract_strided_slice %6 {offsets = [0, 129], sizes = [128, 1], strides = [1, 1]} : vector<128x256xf32> to vector<128x1xf32>
    %10 = tpu.transpose %9, [1, 0] : vector<128x1xf32> -> vector<1x128xf32>
    %11 = vector.broadcast %8 : vector<128x1xf32> to vector<128x128xf32>
    %12 = vector.broadcast %10 : vector<1x128xf32> to vector<128x128xf32>
    %13 = arith.addf %11, %12 : vector<128x128xf32>
    %cst_5 = arith.constant 2.000000e-01 : f32
    %14 = vector.broadcast %cst_5 : f32 to vector<128x128xf32>
    %15 = arith.mulf %14, %13 : vector<128x128xf32>
    %16 = arith.maximumf %13, %15 : vector<128x128xf32>
    %c0_6 = arith.constant 0 : index
    %c0_7 = arith.constant 0 : index
    %17 = vector.load %arg6[%c0_6, %c0_7] : memref<128x128xf32, #tpu.memory_space<vmem>>, vector<128x128xf32>
    %18 = arith.addf %16, %17 : vector<128x128xf32>
    %cst_8 = arith.constant dense<0xFF800000> : vector<128xf32>
    %19 = vector.multi_reduction <maximumf>, %18, %cst_8 [1] : vector<128x128xf32> to vector<128xf32>
    %20 = vector.shape_cast %19 : vector<128xf32> to vector<128x1xf32>
    %21 = vector.broadcast %20 : vector<128x1xf32> to vector<128x128xf32>
    %22 = arith.subf %18, %21 : vector<128x128xf32>
    %23 = math.exp %22 : vector<128x128xf32>
    %cst_9 = arith.constant dense<0.000000e+00> : vector<128xf32>
    %24 = vector.multi_reduction <add>, %23, %cst_9 [1] : vector<128x128xf32> to vector<128xf32>
    %25 = vector.shape_cast %24 : vector<128xf32> to vector<128x1xf32>
    %cst_10 = arith.constant 1.000000e+00 : f32
    %26 = vector.broadcast %cst_10 : f32 to vector<128x1xf32>
    %27 = arith.divf %26, %25 : vector<128x1xf32>
    %cst_11 = arith.constant dense<0.000000e+00> : vector<128x128xf32>
    %28 = tpu.matmul %23, %7, %cst_11 {dimension_numbers = #tpu.dot_dimension_numbers<[1], [0], [0], [1], [0, 0, 1, 1], [], []>} : vector<128x128xf32>, vector<128x128xf32>, vector<128x128xf32> -> vector<128x128xf32>
    %29 = vector.broadcast %27 : vector<128x1xf32> to vector<128x128xf32>
    %30 = arith.mulf %28, %29 : vector<128x128xf32>
    %c0_12 = arith.constant 0 : index
    %c0_13 = arith.constant 0 : index
    %c0_14 = arith.constant 0 : index
    %31 = vector.load %arg4[%c0_12, %c0_13, %c0_14] : memref<1x1x128xf32, #tpu.memory_space<vmem>>, vector<1x1x128xf32>
    %32 = vector.shape_cast %31 : vector<1x1x128xf32> to vector<1x128xf32>
    %33 = vector.broadcast %32 : vector<1x128xf32> to vector<128x128xf32>
    %34 = arith.addf %30, %33 : vector<128x128xf32>
    %cst_15 = arith.constant 2.000000e-01 : f32
    %35 = vector.broadcast %cst_15 : f32 to vector<128x128xf32>
    %36 = arith.mulf %35, %34 : vector<128x128xf32>
    %37 = arith.maximumf %34, %36 : vector<128x128xf32>
    %c0_16 = arith.constant 0 : index
    %c0_17 = arith.constant 0 : index
    %38 = vector.load %arg5[%c0_16, %c0_17] : memref<128x128xf32, #tpu.memory_space<vmem>>, vector<128x128xf32>
    tpu.vector_store %arg5[%c0_16, %c0_17], %37 {strides = array<i32>} : memref<128x128xf32, #tpu.memory_space<vmem>>, vector<128x128xf32>,
    return
  }
  func.func @transform_0(%arg0: i32) -> (i32, i32) {
    %c0_i32 = arith.constant 0 : i32
    %c0_i32_0 = arith.constant 0 : i32
    %c0_i32_1 = arith.constant 0 : i32
    return %c0_i32, %c0_i32_0 : i32, i32
  }
  func.func @transform_1(%arg0: i32) -> (i32, i32) {
    %c0_i32 = arith.constant 0 : i32
    %c0_i32_0 = arith.constant 0 : i32
    %c0_i32_1 = arith.constant 0 : i32
    return %c0_i32, %c0_i32_0 : i32, i32
  }
  func.func @transform_2(%arg0: i32) -> (i32, i32, i32) {
    %c0_i32 = arith.constant 0 : i32
    %c0_i32_0 = arith.constant 0 : i32
    %c0_i32_1 = arith.constant 0 : i32
    return %arg0, %c0_i32, %c0_i32_0 : i32, i32, i32
  }
  func.func @transform_3(%arg0: i32) -> (i32, i32, i32) {
    %c0_i32 = arith.constant 0 : i32
    %c0_i32_0 = arith.constant 0 : i32
    %c0_i32_1 = arith.constant 0 : i32
    return %arg0, %c0_i32, %c0_i32_0 : i32, i32, i32
  }
  func.func @transform_4(%arg0: i32) -> (i32, i32) {
    %c0_i32 = arith.constant 0 : i32
    %c0_i32_0 = arith.constant 0 : i32
    %c0_i32_1 = arith.constant 0 : i32
    return %c0_i32, %c0_i32_0 : i32, i32
  }
}

</mosaic_0001>

<llo_original>
// kernel: tpu_custom_call.1
$region0: #{tpu_custom_call.1}
  #allocation0 [shape = 'u32[]', space=smem, size = 0x4, offset = 0x4, fixed_abs, tag = 'smem constant byte address 0x4 - core index']
  #allocation1 [shape = 'u32[72,128]{1,0:T(1,128)}', space=vmem, size = 0x9000, scoped, tag = 'internal scratch']
  #allocation2 [shape = 'f32[128,128]{1,0:T(8,128)}', space=vmem, size = 0x10000, scoped, tag = 'scratch operand']
  %s0 = inlined_call_operand.hbm [shape: f32[128,128], index: 0, kind: input, shape index: {}]
  %s1 = inlined_call_operand.hbm [shape: s8[128,128], index: 1, kind: input, shape index: {}]
  %s2 = inlined_call_operand.hbm [shape: f32[3,128,256], index: 2, kind: input, shape index: {}]
  %s3 = inlined_call_operand.hbm [shape: f32[3,1,128], index: 3, kind: input, shape index: {}]
  %s4 = inlined_call_operand.hbm [shape: f32[128,128], index: 4, kind: output, shape index: {}]
  %s5 = sld [smem:[#allocation0]]
  $region69: #{tpu_custom_call.1} parent=0
    _
  %s7 = ssub.s32 1, %s5
  %s8 = scalar_select 0, %s7, %s5
  $region1: #{tpu_custom_call.1} parent=0
    #allocation3 [shape = 'u8[65536]{0}', space=vmem, size = 0x10000, scoped, tag = 'input window, operand 0, single buffered']
    #allocation4 [shape = 's32[2]{0}', space=sflag, size = 0x8, scoped, tag = 'scoped memory for tpu_custom_call.1']
    #allocation5 [shape = 's32[2]{0}', space=sflag, size = 0x8, scoped, tag = 'scoped memory for tpu_custom_call.1']
    #allocation6 [shape = 'u8[16384]{0}', space=vmem, size = 0x4000, scoped, tag = 'input window, operand 1, single buffered']
    #allocation7 [shape = 's32[1]{0}', space=sflag, size = 0x4, scoped, tag = 'scoped memory for tpu_custom_call.1']
    #allocation8 [shape = 'u8[262144]{0}', space=vmem, size = 0x40000, scoped, tag = 'input window, operand 2']
    #allocation9 [shape = 'u8[1024]{0}', space=vmem, size = 0x400, scoped, tag = 'input window, operand 3']
    #allocation10 [shape = 'u8[65536]{0}', space=vmem, size = 0x10000, scoped, tag = 'output window, operand 0, single buffered']
    %9 = vsyncpa [#allocation4], 0
    %10 = vsyncpa [#allocation7], 0
    %11 = vsyncpa [#allocation5], 0
    loop: start=0, step=1, limit=5
    $region2: #{tpu_custom_call.1} parent=1 // loop_pre_header
      _
    $region3: #{tpu_custom_call.1} parent=1 // loop_header
      %s13 = sphi 0, %s17
      %p14 = scmp.ge.s32.totalorder %s13, 5
      %s21 = sphi 0, %s21
      %s23 = sphi 0, %s21
      %s24 = sphi 0, %s23
      %s38 = sphi 0, %s24
      %s42 = sphi 0, %s42
      %s44 = sphi 0, %s42
      %s45 = sphi 0, %s44
      %s59 = sphi 0, %s45
      %s65 = sphi 0, %s67
      %s68 = sphi 0, %s65
      %s69 = sphi 0, %s68
      %s85 = sphi 0, %s69
      %s91 = sphi 0, %s93
      %s94 = sphi 0, %s91
      %s95 = sphi 0, %s94
      %s111 = sphi 0, %s95
      %s115 = sphi 0, %s115
      %s117 = sphi 0, %s115
      %s118 = sphi 0, %s117
      %s132 = sphi 0, %s118
    $region4: #{tpu_custom_call.1} parent=1 // loop_header_branch
      %16 = sbr.rel (%p14) target = $region8
    $region5: #{tpu_custom_call.1} parent=1 // loop_body
      %s18 = ssub.s32 %s13, 1
      %s19 = ssub.s32 %s13, 2
      %s20 = sadd.s32 %s13, 1
      %s22 = sadd.s32 %s21, 1
      %p25 = scmp.eq.s32.totalorder %s13, 2
      %p26 = scmp.ne.s32.totalorder %s21, %s23
      %p27 = scmp.eq.s32.totalorder %s13, 0
      %p28 = por %p26, %p27
      %p29 = scmp.ne.s32.totalorder %s21, %s23
      %p30 = scmp.eq.s32.totalorder %s18, 2
      %p31 = por %p29, %p30
      %p32 = scmp.ne.s32.totalorder %s23, %s24
      %p33 = scmp.eq.s32.totalorder %s18, 0
      %p34 = por %p32, %p33
      %p35 = scmp.ne.s32.totalorder %s23, %s24
      %p36 = scmp.eq.s32.totalorder %s19, 2
      %p37 = por %p35, %p36
      %p39 = scmp.ne.s32.totalorder %s24, %s38
      %p40 = scmp.eq.s32.totalorder %s19, 0
      %p41 = por %p39, %p40
      %s43 = sadd.s32 %s42, 1
      %p46 = scmp.eq.s32.totalorder %s13, 2
      %p47 = scmp.ne.s32.totalorder %s42, %s44
      %p48 = scmp.eq.s32.totalorder %s13, 0
      %p49 = por %p47, %p48
      %p50 = scmp.ne.s32.totalorder %s42, %s44
      %p51 = scmp.eq.s32.totalorder %s18, 2
      %p52 = por %p50, %p51
      %p53 = scmp.ne.s32.totalorder %s44, %s45
      %p54 = scmp.eq.s32.totalorder %s18, 0
      %p55 = por %p53, %p54
      %p56 = scmp.ne.s32.totalorder %s44, %s45
      %p57 = scmp.eq.s32.totalorder %s19, 2
      %p58 = por %p56, %p57
      %p60 = scmp.ne.s32.totalorder %s45, %s59
      %p61 = scmp.eq.s32.totalorder %s19, 0
      %p62 = por %p60, %p61
      %s63 = ssub.s32 %s13, %s20
      %p64 = scmp.eq.s32.totalorder %s63, 0
      %s66 = sadd.s32 %s65, 1
      %s67 = scalar_select %p64, %s65, %s66
      %p70 = pneg %p64
      %p71 = scmp.eq.s32.totalorder %s13, 2
      %p72 = por %p70, %p71
      %p73 = scmp.ne.s32.totalorder %s65, %s68
      %p74 = scmp.eq.s32.totalorder %s13, 0
      %p75 = por %p73, %p74
      %p76 = scmp.ne.s32.totalorder %s65, %s68
      %p77 = scmp.eq.s32.totalorder %s18, 2
      %p78 = por %p76, %p77
      %p79 = scmp.ne.s32.totalorder %s68, %s69
      %p80 = scmp.eq.s32.totalorder %s18, 0
      %p81 = por %p79, %p80
      %p82 = scmp.ne.s32.totalorder %s68, %s69
      %p83 = scmp.eq.s32.totalorder %s19, 2
      %p84 = por %p82, %p83
      %p86 = scmp.ne.s32.totalorder %s69, %s85
      %p87 = scmp.eq.s32.totalorder %s19, 0
      %p88 = por %p86, %p87
      %s89 = ssub.s32 %s13, %s20
      %p90 = scmp.eq.s32.totalorder %s89, 0
      %s92 = sadd.s32 %s91, 1
      %s93 = scalar_select %p90, %s91, %s92
      %p96 = pneg %p90
      %p97 = scmp.eq.s32.totalorder %s13, 2
      %p98 = por %p96, %p97
      %p99 = scmp.ne.s32.totalorder %s91, %s94
      %p100 = scmp.eq.s32.totalorder %s13, 0
      %p101 = por %p99, %p100
      %p102 = scmp.ne.s32.totalorder %s91, %s94
      %p103 = scmp.eq.s32.totalorder %s18, 2
      %p104 = por %p102, %p103
      %p105 = scmp.ne.s32.totalorder %s94, %s95
      %p106 = scmp.eq.s32.totalorder %s18, 0
      %p107 = por %p105, %p106
      %p108 = scmp.ne.s32.totalorder %s94, %s95
      %p109 = scmp.eq.s32.totalorder %s19, 2
      %p110 = por %p108, %p109
      %p112 = scmp.ne.s32.totalorder %s95, %s111
      %p113 = scmp.eq.s32.totalorder %s19, 0
      %p114 = por %p112, %p113
      %s116 = sadd.s32 %s115, 1
      %p119 = scmp.eq.s32.totalorder %s13, 2
      %p120 = scmp.ne.s32.totalorder %s115, %s117
      %p121 = scmp.eq.s32.totalorder %s13, 0
      %p122 = por %p120, %p121
      %p123 = scmp.ne.s32.totalorder %s115, %s117
      %p124 = scmp.eq.s32.totalorder %s18, 2
      %p125 = por %p123, %p124
      %p126 = scmp.ne.s32.totalorder %s117, %s118
      %p127 = scmp.eq.s32.totalorder %s18, 0
      %p128 = por %p126, %p127
      %p129 = scmp.ne.s32.totalorder %s117, %s118
      %p130 = scmp.eq.s32.totalorder %s19, 2
      %p131 = por %p129, %p130
      %p133 = scmp.ne.s32.totalorder %s118, %s132
      %p134 = scmp.eq.s32.totalorder %s19, 0
      %p135 = por %p133, %p134
      %p136 = scmp.le.s32.totalorder 1, %s13
      %p137 = scmp.lt.s32.totalorder %s13, 4
      %p138 = pnand %p136, %p137
      %p139 = pneg %p138
      // Predicated region
      $region9: #{tpu_custom_call.1} parent=5 // pred_check
        _
      $region10: #{tpu_custom_call.1} parent=5 // pred_check_branch
        %141 = sbr.rel (%p138) target = $region12
      $region11: #{tpu_custom_call.1} parent=5 // pred_region
        %s142 = ssub.s32 %s13, 1
        // Predicated region
        $region13: #{tpu_custom_call.1} parent=11 // pred_check
          %p143 = pneg %p34
        $region14: #{tpu_custom_call.1} parent=11 // pred_check_branch
          %145 = sbr.rel (%p143) target = $region16
        $region15: #{tpu_custom_call.1} parent=11 // pred_region
          %147 = vsyncadd [#allocation4], 0
          %s148 = sshll.u32 %s0, 4
          %s149 = int_to_ptr.hbm [resolvable:$true] %s148
          %s150 = sshll.u32 [#allocation3], 4
          %s151 = int_to_ptr.vmem [resolvable:$true] %s150
          %156 = dma.hbm_to_vmem [thread:$0]  %s149, 2048, %s151, [#allocation4], 128, 128, 8
        $region16: #{tpu_custom_call.1} parent=11 // pred_fallthru
          _
        // Predicated region
        $region17: #{tpu_custom_call.1} parent=11 // pred_check
          %p157 = pneg %p55
        $region18: #{tpu_custom_call.1} parent=11 // pred_check_branch
          %159 = sbr.rel (%p157) target = $region20
        $region19: #{tpu_custom_call.1} parent=11 // pred_region
          %161 = vsyncadd [#allocation7], 0
          %s162 = sshll.u32 %s1, 4
          %s163 = int_to_ptr.hbm [resolvable:$true] %s162
          %s164 = sshll.u32 [#allocation6], 4
          %s165 = int_to_ptr.vmem [resolvable:$true] %s164
          %170 = dma.hbm_to_vmem [thread:$0]  %s163, 512, %s165, [#allocation7], 128, 128, 8
        $region20: #{tpu_custom_call.1} parent=11 // pred_fallthru
          _
      $region12: #{tpu_custom_call.1} parent=5 // pred_fallthru
        _
      %p171 = scmp.lt.s32.totalorder %s13, 3
      // Predicated region
      $region21: #{tpu_custom_call.1} parent=5 // pred_check
        %p172 = pneg %p171
      $region22: #{tpu_custom_call.1} parent=5 // pred_check_branch
        %174 = sbr.rel (%p172) target = $region24
      $region23: #{tpu_custom_call.1} parent=5 // pred_region
        // Predicated region
        $region25: #{tpu_custom_call.1} parent=23 // pred_check
          %p175 = pneg %p75
        $region26: #{tpu_custom_call.1} parent=23 // pred_check_branch
          %177 = sbr.rel (%p175) target = $region28
        $region27: #{tpu_custom_call.1} parent=23 // pred_region
          %s178 = sand.u32 %s13, 1
          %s179 = scalar_lea.sflag [#allocation4], %s178
          %s180 = sand.u32 %s65, 1
          %s181 = smul.addr %s180, 256
          %s182 = scalar_lea.vmem [#allocation8], %s181
          %184 = vsyncadd %s179, 0
          %s185 = smul.addr %s13, 32
          %s186 = smul.addr %s185, 8
          %s187 = scalar_lea.hbm %s2, %s186
          %s188 = sshll.u32 %s187, 4
          %s189 = int_to_ptr.hbm [resolvable:$true] %s188
          %s190 = sshll.u32 %s182, 4
          %s191 = int_to_ptr.vmem [resolvable:$true] %s190
          %196 = dma.hbm_to_vmem [thread:$0]  %s189, 4096, %s191, %s179, 256, 256, 16
        $region28: #{tpu_custom_call.1} parent=23 // pred_fallthru
          _
        // Predicated region
        $region29: #{tpu_custom_call.1} parent=23 // pred_check
          %p197 = pneg %p101
        $region30: #{tpu_custom_call.1} parent=23 // pred_check_branch
          %199 = sbr.rel (%p197) target = $region32
        $region31: #{tpu_custom_call.1} parent=23 // pred_region
          %s200 = sand.u32 %s13, 1
          %s201 = scalar_lea.sflag [#allocation4], %s200
          %s202 = sand.u32 %s91, 1
          %s203 = scalar_lea.vmem [#allocation9], %s202
          %205 = vsyncadd %s201, 0
          %s206 = scalar_lea.hbm %s3, %s13
          %s208 = sshll.u32 %s206, 4
          %s209 = int_to_ptr.hbm [resolvable:$true] %s208
          %s210 = sshll.u32 %s203, 4
          %s211 = int_to_ptr.vmem [resolvable:$true] %s210
          %213 = dma.hbm_to_vmem [thread:$0]  %s209, 16, %s211, %s201
        $region32: #{tpu_custom_call.1} parent=23 // pred_fallthru
          _
      $region24: #{tpu_custom_call.1} parent=5 // pred_fallthru
        _
      %p214 = scmp.le.s32.totalorder 1, %s13
      %p215 = scmp.lt.s32.totalorder %s13, 4
      %p216 = pnand %p214, %p215
      %p217 = pneg %p216
      // Predicated region
      $region33: #{tpu_custom_call.1} parent=5 // pred_check
        _
      $region34: #{tpu_custom_call.1} parent=5 // pred_check_branch
        %219 = sbr.rel (%p216) target = $region36
      $region35: #{tpu_custom_call.1} parent=5 // pred_region
        %s220 = ssub.s32 %s13, 1
        // Predicated region
        $region37: #{tpu_custom_call.1} parent=35 // pred_check
          %p221 = pneg %p34
        $region38: #{tpu_custom_call.1} parent=35 // pred_check_branch
          %223 = sbr.rel (%p221) target = $region40
        $region39: #{tpu_custom_call.1} parent=35 // pred_region
          %225 = dma.done [#allocation4], 2048
        $region40: #{tpu_custom_call.1} parent=35 // pred_fallthru
          _
        // Predicated region
        $region41: #{tpu_custom_call.1} parent=35 // pred_check
          %p226 = pneg %p55
        $region42: #{tpu_custom_call.1} parent=35 // pred_check_branch
          %228 = sbr.rel (%p226) target = $region44
        $region43: #{tpu_custom_call.1} parent=35 // pred_region
          %230 = dma.done [#allocation7], 512
        $region44: #{tpu_custom_call.1} parent=35 // pred_fallthru
          _
        %s231 = sand.u32 %s18, 1
        %s232 = scalar_lea.sflag [#allocation4], %s231
        %s233 = sand.u32 %s68, 1
        %s234 = smul.addr %s233, 256
        %s235 = scalar_lea.vmem [#allocation8], %s234
        // Predicated region
        $region45: #{tpu_custom_call.1} parent=35 // pred_check
          %p236 = pneg %p81
        $region46: #{tpu_custom_call.1} parent=35 // pred_check_branch
          %238 = sbr.rel (%p236) target = $region48
        $region47: #{tpu_custom_call.1} parent=35 // pred_region
          %240 = dma.done %s232, 4096
        $region48: #{tpu_custom_call.1} parent=35 // pred_fallthru
          _
        %s241 = sand.u32 %s18, 1
        %s242 = scalar_lea.sflag [#allocation4], %s241
        %s243 = sand.u32 %s94, 1
        %s244 = scalar_lea.vmem [#allocation9], %s243
        // Predicated region
        $region49: #{tpu_custom_call.1} parent=35 // pred_check
          %p245 = pneg %p107
        $region50: #{tpu_custom_call.1} parent=35 // pred_check_branch
          %247 = sbr.rel (%p245) target = $region52
        $region51: #{tpu_custom_call.1} parent=35 // pred_region
          %249 = dma.done %s242, 16
        $region52: #{tpu_custom_call.1} parent=35 // pred_fallthru
          _
        %p250 = pneg %p34
        %p251 = pneg %p31
        %p252 = pneg %p55
        %p253 = pneg %p52
        %s254 = sand.u32 %s18, 1
        %s255 = scalar_lea.sflag [#allocation4], %s254
        %s256 = sand.u32 %s68, 1
        %s257 = smul.addr %s256, 256
        %s258 = scalar_lea.vmem [#allocation8], %s257
        %p259 = pneg %p81
        %p260 = pneg %p78
        %s261 = sand.u32 %s18, 1
        %s262 = scalar_lea.sflag [#allocation4], %s261
        %s263 = sand.u32 %s94, 1
        %s264 = scalar_lea.vmem [#allocation9], %s263
        %p265 = pneg %p107
        %p266 = pneg %p104
        %p267 = pneg %p128
        %p268 = pneg %p125
        %p269 = scmp.eq.s32.totalorder %s18, 0
        // Predicated region
        $region53: #{tpu_custom_call.1} parent=35 // pred_check
          %p270 = pneg %p269
        $region54: #{tpu_custom_call.1} parent=35 // pred_check_branch
          %272 = sbr.rel (%p270) target = $region56
        $region55: #{tpu_custom_call.1} parent=35 // pred_region
          %v273 = vld [vmem:[#allocation3] sm:$0xff]
          %v274 = vld [vmem:[#allocation3 + $0x8] sm:$0xff]
          %v275 = vld [vmem:[#allocation3 + $0x10] sm:$0xff]
          %v276 = vld [vmem:[#allocation3 + $0x18] sm:$0xff]
          %v277 = vld [vmem:[#allocation3 + $0x20] sm:$0xff]
          %v278 = vld [vmem:[#allocation3 + $0x28] sm:$0xff]
          %v279 = vld [vmem:[#allocation3 + $0x30] sm:$0xff]
          %v280 = vld [vmem:[#allocation3 + $0x38] sm:$0xff]
          %v281 = vld [vmem:[#allocation3 + $0x40] sm:$0xff]
          %v282 = vld [vmem:[#allocation3 + $0x48] sm:$0xff]
          %v283 = vld [vmem:[#allocation3 + $0x50] sm:$0xff]
          %v284 = vld [vmem:[#allocation3 + $0x58] sm:$0xff]
          %v285 = vld [vmem:[#allocation3 + $0x60] sm:$0xff]
          %v286 = vld [vmem:[#allocation3 + $0x68] sm:$0xff]
          %v287 = vld [vmem:[#allocation3 + $0x70] sm:$0xff]
          %v288 = vld [vmem:[#allocation3 + $0x78] sm:$0xff]
          %289 = vst [vmem:[#allocation10] sm:$0xff] %v273
          %290 = vst [vmem:[#allocation10 + $0x8] sm:$0xff] %v274
          %291 = vst [vmem:[#allocation10 + $0x10] sm:$0xff] %v275
          %292 = vst [vmem:[#allocation10 + $0x18] sm:$0xff] %v276
          %293 = vst [vmem:[#allocation10 + $0x20] sm:$0xff] %v277
          %294 = vst [vmem:[#allocation10 + $0x28] sm:$0xff] %v278
          %295 = vst [vmem:[#allocation10 + $0x30] sm:$0xff] %v279
          %296 = vst [vmem:[#allocation10 + $0x38] sm:$0xff] %v280
          %297 = vst [vmem:[#allocation10 + $0x40] sm:$0xff] %v281
          %298 = vst [vmem:[#allocation10 + $0x48] sm:$0xff] %v282
          %299 = vst [vmem:[#allocation10 + $0x50] sm:$0xff] %v283
          %300 = vst [vmem:[#allocation10 + $0x58] sm:$0xff] %v284
          %301 = vst [vmem:[#allocation10 + $0x60] sm:$0xff] %v285
          %302 = vst [vmem:[#allocation10 + $0x68] sm:$0xff] %v286
          %303 = vst [vmem:[#allocation10 + $0x70] sm:$0xff] %v287
          %304 = vst [vmem:[#allocation10 + $0x78] sm:$0xff] %v288
          %v305 = vld [vmem:[#allocation6] sm:$0xff]
          %v306 = vld [vmem:[#allocation6 + $0x8] sm:$0xff]
          %v307 = vld [vmem:[#allocation6 + $0x10] sm:$0xff]
          %v308 = vld [vmem:[#allocation6 + $0x18] sm:$0xff]
          %v309 = vunpack.c.0.s8 %v305
          %v310 = vunpack.c.1.s8 %v305
          %v311 = vunpack.c.2.s8 %v305
          %v312 = vunpack.c.3.s8 %v305
          %v313 = vunpack.c.0.s8 %v306
          %v314 = vunpack.c.1.s8 %v306
          %v315 = vunpack.c.2.s8 %v306
          %v316 = vunpack.c.3.s8 %v306
          %v317 = vunpack.c.0.s8 %v307
          %v318 = vunpack.c.1.s8 %v307
          %v319 = vunpack.c.2.s8 %v307
          %v320 = vunpack.c.3.s8 %v307
          %v321 = vunpack.c.0.s8 %v308
          %v322 = vunpack.c.1.s8 %v308
          %v323 = vunpack.c.2.s8 %v308
          %v324 = vunpack.c.3.s8 %v308
          %v325 = vcvt.s32.f32 %v309
          %v326 = vcvt.s32.f32 %v310
          %v327 = vcvt.s32.f32 %v311
          %v328 = vcvt.s32.f32 %v312
          %v329 = vcvt.s32.f32 %v313
          %v330 = vcvt.s32.f32 %v314
          %v331 = vcvt.s32.f32 %v315
          %v332 = vcvt.s32.f32 %v316
          %v333 = vcvt.s32.f32 %v317
          %v334 = vcvt.s32.f32 %v318
          %v335 = vcvt.s32.f32 %v319
          %v336 = vcvt.s32.f32 %v320
          %v337 = vcvt.s32.f32 %v321
          %v338 = vcvt.s32.f32 %v322
          %v339 = vcvt.s32.f32 %v323
          %v340 = vcvt.s32.f32 %v324
          %vm341 = vcmp.gt.f32.partialorder %v325, 0.0
          %vm342 = vcmp.gt.f32.partialorder %v326, 0.0
          %vm343 = vcmp.gt.f32.partialorder %v327, 0.0
          %vm344 = vcmp.gt.f32.partialorder %v328, 0.0
          %vm345 = vcmp.gt.f32.partialorder %v329, 0.0
          %vm346 = vcmp.gt.f32.partialorder %v330, 0.0
          %vm347 = vcmp.gt.f32.partialorder %v331, 0.0
          %vm348 = vcmp.gt.f32.partialorder %v332, 0.0
          %vm349 = vcmp.gt.f32.partialorder %v333, 0.0
          %vm350 = vcmp.gt.f32.partialorder %v334, 0.0
          %vm351 = vcmp.gt.f32.partialorder %v335, 0.0
          %vm352 = vcmp.gt.f32.partialorder %v336, 0.0
          %vm353 = vcmp.gt.f32.partialorder %v337, 0.0
          %vm354 = vcmp.gt.f32.partialorder %v338, 0.0
          %vm355 = vcmp.gt.f32.partialorder %v339, 0.0
          %vm356 = vcmp.gt.f32.partialorder %v340, 0.0
          %v357 = vsel %vm341, 0.0, -1e+30
          %v358 = vsel %vm342, 0.0, -1e+30
          %v359 = vsel %vm343, 0.0, -1e+30
          %v360 = vsel %vm344, 0.0, -1e+30
          %v361 = vsel %vm345, 0.0, -1e+30
          %v362 = vsel %vm346, 0.0, -1e+30
          %v363 = vsel %vm347, 0.0, -1e+30
          %v364 = vsel %vm348, 0.0, -1e+30
          %v365 = vsel %vm349, 0.0, -1e+30
          %v366 = vsel %vm350, 0.0, -1e+30
          %v367 = vsel %vm351, 0.0, -1e+30
          %v368 = vsel %vm352, 0.0, -1e+30
          %v369 = vsel %vm353, 0.0, -1e+30
          %v370 = vsel %vm354, 0.0, -1e+30
          %v371 = vsel %vm355, 0.0, -1e+30
          %v372 = vsel %vm356, 0.0, -1e+30
          %373 = vst [vmem:[#allocation2] sm:$0xff] %v357
          %374 = vst [vmem:[#allocation2 + $0x8] sm:$0xff] %v358
          %375 = vst [vmem:[#allocation2 + $0x10] sm:$0xff] %v359
          %376 = vst [vmem:[#allocation2 + $0x18] sm:$0xff] %v360
          %377 = vst [vmem:[#allocation2 + $0x20] sm:$0xff] %v361
          %378 = vst [vmem:[#allocation2 + $0x28] sm:$0xff] %v362
          %379 = vst [vmem:[#allocation2 + $0x30] sm:$0xff] %v363
          %380 = vst [vmem:[#allocation2 + $0x38] sm:$0xff] %v364
          %381 = vst [vmem:[#allocation2 + $0x40] sm:$0xff] %v365
          %382 = vst [vmem:[#allocation2 + $0x48] sm:$0xff] %v366
          %383 = vst [vmem:[#allocation2 + $0x50] sm:$0xff] %v367
          %384 = vst [vmem:[#allocation2 + $0x58] sm:$0xff] %v368
          %385 = vst [vmem:[#allocation2 + $0x60] sm:$0xff] %v369
          %386 = vst [vmem:[#allocation2 + $0x68] sm:$0xff] %v370
          %387 = vst [vmem:[#allocation2 + $0x70] sm:$0xff] %v371
          %388 = vst [vmem:[#allocation2 + $0x78] sm:$0xff] %v372
        $region56: #{tpu_custom_call.1} parent=35 // pred_fallthru
          _
        %v389 = vld [vmem:[#allocation10] sm:$0xff]
        %v390 = vld [vmem:[#allocation10 + $0x8] sm:$0xff]
        %v391 = vld [vmem:[#allocation10 + $0x10] sm:$0xff]
        %v392 = vld [vmem:[#allocation10 + $0x18] sm:$0xff]
        %v393 = vld [vmem:[#allocation10 + $0x20] sm:$0xff]
        %v394 = vld [vmem:[#allocation10 + $0x28] sm:$0xff]
        %v395 = vld [vmem:[#allocation10 + $0x30] sm:$0xff]
        %v396 = vld [vmem:[#allocation10 + $0x38] sm:$0xff]
        %v397 = vld [vmem:[#allocation10 + $0x40] sm:$0xff]
        %v398 = vld [vmem:[#allocation10 + $0x48] sm:$0xff]
        %v399 = vld [vmem:[#allocation10 + $0x50] sm:$0xff]
        %v400 = vld [vmem:[#allocation10 + $0x58] sm:$0xff]
        %v401 = vld [vmem:[#allocation10 + $0x60] sm:$0xff]
        %v402 = vld [vmem:[#allocation10 + $0x68] sm:$0xff]
        %v403 = vld [vmem:[#allocation10 + $0x70] sm:$0xff]
        %v404 = vld [vmem:[#allocation10 + $0x78] sm:$0xff]
        %v405 = vld [vmem:[%s235] sm:$0xff]
        %v406 = vld [vmem:[%s235 + $0x8] sm:$0xff]
        %v407 = vld [vmem:[%s235 + $0x10] sm:$0xff]
        %v408 = vld [vmem:[%s235 + $0x18] sm:$0xff]
        %v409 = vld [vmem:[%s235 + $0x20] sm:$0xff]
        %v410 = vld [vmem:[%s235 + $0x28] sm:$0xff]
        %v411 = vld [vmem:[%s235 + $0x30] sm:$0xff]
        %v412 = vld [vmem:[%s235 + $0x38] sm:$0xff]
        %v413 = vld [vmem:[%s235 + $0x40] sm:$0xff]
        %v414 = vld [vmem:[%s235 + $0x48] sm:$0xff]
        %v415 = vld [vmem:[%s235 + $0x50] sm:$0xff]
        %v416 = vld [vmem:[%s235 + $0x58] sm:$0xff]
        %v417 = vld [vmem:[%s235 + $0x60] sm:$0xff]
        %v418 = vld [vmem:[%s235 + $0x68] sm:$0xff]
        %v419 = vld [vmem:[%s235 + $0x70] sm:$0xff]
        %v420 = vld [vmem:[%s235 + $0x78] sm:$0xff]
        %v421 = vld [vmem:[%s235 + $0x80] sm:$0xff]
        %v422 = vld [vmem:[%s235 + $0x88] sm:$0xff]
        %v423 = vld [vmem:[%s235 + $0x90] sm:$0xff]
        %v424 = vld [vmem:[%s235 + $0x98] sm:$0xff]
        %v425 = vld [vmem:[%s235 + $0xa0] sm:$0xff]
        %v426 = vld [vmem:[%s235 + $0xa8] sm:$0xff]
        %v427 = vld [vmem:[%s235 + $0xb0] sm:$0xff]
        %v428 = vld [vmem:[%s235 + $0xb8] sm:$0xff]
        %v429 = vld [vmem:[%s235 + $0xc0] sm:$0xff]
        %v430 = vld [vmem:[%s235 + $0xc8] sm:$0xff]
        %v431 = vld [vmem:[%s235 + $0xd0] sm:$0xff]
        %v432 = vld [vmem:[%s235 + $0xd8] sm:$0xff]
        %v433 = vld [vmem:[%s235 + $0xe0] sm:$0xff]
        %v434 = vld [vmem:[%s235 + $0xe8] sm:$0xff]
        %v435 = vld [vmem:[%s235 + $0xf0] sm:$0xff]
        %v436 = vld [vmem:[%s235 + $0xf8] sm:$0xff]
        %437 = vmatpush.msra.mxu0 %v435
        %438 = vmatpush.msra.mxu0 %v433
        %439 = vmatpush.msra.mxu0 %v431
        %440 = vmatpush.msra.mxu0 %v429
        %441 = vmatpush.msra.mxu0 %v427
        %442 = vmatpush.msra.mxu0 %v425
        %443 = vmatpush.msra.mxu0 %v423
        %444 = vmatpush.msra.mxu0 %v421
        %445 = vmatpush.msra.mxu0 %v419
        %446 = vmatpush.msra.mxu0 %v417
        %447 = vmatpush.msra.mxu0 %v415
        %448 = vmatpush.msra.mxu0 %v413
        %449 = vmatpush.msra.mxu0 %v411
        %450 = vmatpush.msra.mxu0 %v409
        %451 = vmatpush.msra.mxu0 %v407
        %452 = vmatpush.msra.mxu0 %v405
        %453 = vmatmul.f32.gmra.mxu0 %v389
        %v454 = vpop.f32.mrf.mxu0
        %v455 = vadd.f32 0.0, %v454
        %456 = vmatmul.f32.gmra.mxu0 %v390
        %v457 = vpop.f32.mrf.mxu0
        %v458 = vadd.f32 0.0, %v457
        %459 = vmatmul.f32.gmra.mxu0 %v391
        %v460 = vpop.f32.mrf.mxu0
        %v461 = vadd.f32 0.0, %v460
        %462 = vmatmul.f32.gmra.mxu0 %v392
        %v463 = vpop.f32.mrf.mxu0
        %v464 = vadd.f32 0.0, %v463
        %465 = vmatmul.f32.gmra.mxu0 %v393
        %v466 = vpop.f32.mrf.mxu0
        %v467 = vadd.f32 0.0, %v466
        %468 = vmatmul.f32.gmra.mxu0 %v394
        %v469 = vpop.f32.mrf.mxu0
        %v470 = vadd.f32 0.0, %v469
        %471 = vmatmul.f32.gmra.mxu0 %v395
        %v472 = vpop.f32.mrf.mxu0
        %v473 = vadd.f32 0.0, %v472
        %474 = vmatmul.f32.gmra.mxu0 %v396
        %v475 = vpop.f32.mrf.mxu0
        %v476 = vadd.f32 0.0, %v475
        %477 = vmatmul.f32.gmra.mxu0 %v397
        %v478 = vpop.f32.mrf.mxu0
        %v479 = vadd.f32 0.0, %v478
        %480 = vmatmul.f32.gmra.mxu0 %v398
        %v481 = vpop.f32.mrf.mxu0
        %v482 = vadd.f32 0.0, %v481
        %483 = vmatmul.f32.gmra.mxu0 %v399
        %v484 = vpop.f32.mrf.mxu0
        %v485 = vadd.f32 0.0, %v484
        %486 = vmatmul.f32.gmra.mxu0 %v400
        %v487 = vpop.f32.mrf.mxu0
        %v488 = vadd.f32 0.0, %v487
        %489 = vmatmul.f32.gmra.mxu0 %v401
        %v490 = vpop.f32.mrf.mxu0
        %v491 = vadd.f32 0.0, %v490
        %492 = vmatmul.f32.gmra.mxu0 %v402
        %v493 = vpop.f32.mrf.mxu0
        %v494 = vadd.f32 0.0, %v493
        %495 = vmatmul.f32.gmra.mxu0 %v403
        %v496 = vpop.f32.mrf.mxu0
        %v497 = vadd.f32 0.0, %v496
        %498 = vmatmul.f32.gmra.mxu0 %v404
        %v499 = vpop.f32.mrf.mxu0
        %v500 = vadd.f32 0.0, %v499
        %501 = vdwg.mxu0
        %502 = vmatpush.msra.mxu0 %v436
        %503 = vmatpush.msra.mxu0 %v434
        %504 = vmatpush.msra.mxu0 %v432
        %505 = vmatpush.msra.mxu0 %v430
        %506 = vmatpush.msra.mxu0 %v428
        %507 = vmatpush.msra.mxu0 %v426
        %508 = vmatpush.msra.mxu0 %v424
        %509 = vmatpush.msra.mxu0 %v422
        %510 = vmatpush.msra.mxu0 %v420
        %511 = vmatpush.msra.mxu0 %v418
        %512 = vmatpush.msra.mxu0 %v416
        %513 = vmatpush.msra.mxu0 %v414
        %514 = vmatpush.msra.mxu0 %v412
        %515 = vmatpush.msra.mxu0 %v410
        %516 = vmatpush.msra.mxu0 %v408
        %517 = vmatpush.msra.mxu0 %v406
        %518 = vmatmul.f32.gmra.mxu0 %v389
        %v519 = vpop.f32.mrf.mxu0
        %v520 = vadd.f32 0.0, %v519
        %521 = vmatmul.f32.gmra.mxu0 %v390
        %v522 = vpop.f32.mrf.mxu0
        %v523 = vadd.f32 0.0, %v522
        %524 = vmatmul.f32.gmra.mxu0 %v391
        %v525 = vpop.f32.mrf.mxu0
        %v526 = vadd.f32 0.0, %v525
        %527 = vmatmul.f32.gmra.mxu0 %v392
        %v528 = vpop.f32.mrf.mxu0
        %v529 = vadd.f32 0.0, %v528
        %530 = vmatmul.f32.gmra.mxu0 %v393
        %v531 = vpop.f32.mrf.mxu0
        %v532 = vadd.f32 0.0, %v531
        %533 = vmatmul.f32.gmra.mxu0 %v394
        %v534 = vpop.f32.mrf.mxu0
        %v535 = vadd.f32 0.0, %v534
        %536 = vmatmul.f32.gmra.mxu0 %v395
        %v537 = vpop.f32.mrf.mxu0
        %v538 = vadd.f32 0.0, %v537
        %539 = vmatmul.f32.gmra.mxu0 %v396
        %v540 = vpop.f32.mrf.mxu0
        %v541 = vadd.f32 0.0, %v540
        %542 = vmatmul.f32.gmra.mxu0 %v397
        %v543 = vpop.f32.mrf.mxu0
        %v544 = vadd.f32 0.0, %v543
        %545 = vmatmul.f32.gmra.mxu0 %v398
        %v546 = vpop.f32.mrf.mxu0
        %v547 = vadd.f32 0.0, %v546
        %548 = vmatmul.f32.gmra.mxu0 %v399
        %v549 = vpop.f32.mrf.mxu0
        %v550 = vadd.f32 0.0, %v549
        %551 = vmatmul.f32.gmra.mxu0 %v400
        %v552 = vpop.f32.mrf.mxu0
        %v553 = vadd.f32 0.0, %v552
        %554 = vmatmul.f32.gmra.mxu0 %v401
        %v555 = vpop.f32.mrf.mxu0
        %v556 = vadd.f32 0.0, %v555
        %557 = vmatmul.f32.gmra.mxu0 %v402
        %v558 = vpop.f32.mrf.mxu0
        %v559 = vadd.f32 0.0, %v558
        %560 = vmatmul.f32.gmra.mxu0 %v403
        %v561 = vpop.f32.mrf.mxu0
        %v562 = vadd.f32 0.0, %v561
        %563 = vmatmul.f32.gmra.mxu0 %v404
        %v564 = vpop.f32.mrf.mxu0
        %v565 = vadd.f32 0.0, %v564
        %566 = vdwg.mxu0
        %583 = vrot.lane.b32.xlu0 %v520, 127
        %v584 = vpop.permute.xlu0 %583
        %585 = vrot.lane.b32.xlu0 %v523, 127
        %v586 = vpop.permute.xlu0 %585
        %587 = vrot.lane.b32.xlu0 %v526, 127
        %v588 = vpop.permute.xlu0 %587
        %589 = vrot.lane.b32.xlu0 %v529, 127
        %v590 = vpop.permute.xlu0 %589
        %591 = vrot.lane.b32.xlu0 %v532, 127
        %v592 = vpop.permute.xlu0 %591
        %593 = vrot.lane.b32.xlu0 %v535, 127
        %v594 = vpop.permute.xlu0 %593
        %595 = vrot.lane.b32.xlu0 %v538, 127
        %v596 = vpop.permute.xlu0 %595
        %597 = vrot.lane.b32.xlu0 %v541, 127
        %v598 = vpop.permute.xlu0 %597
        %599 = vrot.lane.b32.xlu0 %v544, 127
        %v600 = vpop.permute.xlu0 %599
        %601 = vrot.lane.b32.xlu0 %v547, 127
        %v602 = vpop.permute.xlu0 %601
        %603 = vrot.lane.b32.xlu0 %v550, 127
        %v604 = vpop.permute.xlu0 %603
        %605 = vrot.lane.b32.xlu0 %v553, 127
        %v606 = vpop.permute.xlu0 %605
        %607 = vrot.lane.b32.xlu0 %v556, 127
        %v608 = vpop.permute.xlu0 %607
        %609 = vrot.lane.b32.xlu0 %v559, 127
        %v610 = vpop.permute.xlu0 %609
        %611 = vrot.lane.b32.xlu0 %v562, 127
        %v612 = vpop.permute.xlu0 %611
        %613 = vrot.lane.b32.xlu0 %v565, 127
        %v614 = vpop.permute.xlu0 %613
        %631 = vxpose.xlu0.b32.start [1/16] %v584, 128
        %632 = vxpose.xlu0.b32.cont [2/16] %v586, 128
        %633 = vxpose.xlu0.b32.cont [3/16] %v588, 128
        %634 = vxpose.xlu0.b32.cont [4/16] %v590, 128
        %635 = vxpose.xlu0.b32.cont [5/16] %v592, 128
        %636 = vxpose.xlu0.b32.cont [6/16] %v594, 128
        %637 = vxpose.xlu0.b32.cont [7/16] %v596, 128
        %638 = vxpose.xlu0.b32.cont [8/16] %v598, 128
        %639 = vxpose.xlu0.b32.cont [9/16] %v600, 128
        %640 = vxpose.xlu0.b32.cont [10/16] %v602, 128
        %641 = vxpose.xlu0.b32.cont [11/16] %v604, 128
        %642 = vxpose.xlu0.b32.cont [12/16] %v606, 128
        %643 = vxpose.xlu0.b32.cont [13/16] %v608, 128
        %644 = vxpose.xlu0.b32.cont [14/16] %v610, 128
        %645 = vxpose.xlu0.b32.cont [15/16] %v612, 128
        %646 = vxpose.xlu0.b32.end [16/16] %v614, 128
        %v647 = vpop.trf.xlu0
        %v648 = vpop.trf.xlu0
        %v649 = vpop.trf.xlu0
        %v650 = vpop.trf.xlu0
        %v651 = vpop.trf.xlu0
        %v652 = vpop.trf.xlu0
        %v653 = vpop.trf.xlu0
        %v654 = vpop.trf.xlu0
        %v655 = vpop.trf.xlu0
        %v656 = vpop.trf.xlu0
        %v657 = vpop.trf.xlu0
        %v658 = vpop.trf.xlu0
        %v659 = vpop.trf.xlu0
        %v660 = vpop.trf.xlu0
        %v661 = vpop.trf.xlu0
        %v662 = vpop.trf.xlu0
        %663 = vset.pattern.permute.xlu0 0
        %664 = vperm.xlu0 %663, %v520
        %v665 = vpop.permute.xlu0 %664
        %667 = vset.pattern.permute.xlu0 0
        %668 = vperm.xlu0 %667, %v523
        %v669 = vpop.permute.xlu0 %668
        %671 = vset.pattern.permute.xlu0 0
        %672 = vperm.xlu0 %671, %v526
        %v673 = vpop.permute.xlu0 %672
        %675 = vset.pattern.permute.xlu0 0
        %676 = vperm.xlu0 %675, %v529
        %v677 = vpop.permute.xlu0 %676
        %679 = vset.pattern.permute.xlu0 0
        %680 = vperm.xlu0 %679, %v532
        %v681 = vpop.permute.xlu0 %680
        %683 = vset.pattern.permute.xlu0 0
        %684 = vperm.xlu0 %683, %v535
        %v685 = vpop.permute.xlu0 %684
        %687 = vset.pattern.permute.xlu0 0
        %688 = vperm.xlu0 %687, %v538
        %v689 = vpop.permute.xlu0 %688
        %691 = vset.pattern.permute.xlu0 0
        %692 = vperm.xlu0 %691, %v541
        %v693 = vpop.permute.xlu0 %692
        %695 = vset.pattern.permute.xlu0 0
        %696 = vperm.xlu0 %695, %v544
        %v697 = vpop.permute.xlu0 %696
        %699 = vset.pattern.permute.xlu0 0
        %700 = vperm.xlu0 %699, %v547
        %v701 = vpop.permute.xlu0 %700
        %703 = vset.pattern.permute.xlu0 0
        %704 = vperm.xlu0 %703, %v550
        %v705 = vpop.permute.xlu0 %704
        %707 = vset.pattern.permute.xlu0 0
        %708 = vperm.xlu0 %707, %v553
        %v709 = vpop.permute.xlu0 %708
        %711 = vset.pattern.permute.xlu0 0
        %712 = vperm.xlu0 %711, %v556
        %v713 = vpop.permute.xlu0 %712
        %715 = vset.pattern.permute.xlu0 0
        %716 = vperm.xlu0 %715, %v559
        %v717 = vpop.permute.xlu0 %716
        %719 = vset.pattern.permute.xlu0 0
        %720 = vperm.xlu0 %719, %v562
        %v721 = vpop.permute.xlu0 %720
        %723 = vset.pattern.permute.xlu0 0
        %724 = vperm.xlu0 %723, %v565
        %v725 = vpop.permute.xlu0 %724
        %v727 = vperm.slane %v647, 0
        %v728 = vadd.f32 %v665, %v727
        %v729 = vadd.f32 %v669, %v727
        %v730 = vadd.f32 %v673, %v727
        %v731 = vadd.f32 %v677, %v727
        %v732 = vadd.f32 %v681, %v727
        %v733 = vadd.f32 %v685, %v727
        %v734 = vadd.f32 %v689, %v727
        %v735 = vadd.f32 %v693, %v727
        %v736 = vadd.f32 %v697, %v727
        %v737 = vadd.f32 %v701, %v727
        %v738 = vadd.f32 %v705, %v727
        %v739 = vadd.f32 %v709, %v727
        %v740 = vadd.f32 %v713, %v727
        %v741 = vadd.f32 %v717, %v727
        %v742 = vadd.f32 %v721, %v727
        %v743 = vadd.f32 %v725, %v727
        %v744 = vmul.f32 %v728, 0.2
        %v745 = vmul.f32 %v729, 0.2
        %v746 = vmul.f32 %v730, 0.2
        %v747 = vmul.f32 %v731, 0.2
        %v748 = vmul.f32 %v732, 0.2
        %v749 = vmul.f32 %v733, 0.2
        %v750 = vmul.f32 %v734, 0.2
        %v751 = vmul.f32 %v735, 0.2
        %v752 = vmul.f32 %v736, 0.2
        %v753 = vmul.f32 %v737, 0.2
        %v754 = vmul.f32 %v738, 0.2
        %v755 = vmul.f32 %v739, 0.2
        %v756 = vmul.f32 %v740, 0.2
        %v757 = vmul.f32 %v741, 0.2
        %v758 = vmul.f32 %v742, 0.2
        %v759 = vmul.f32 %v743, 0.2
        %v760 = vmax.f32 %v728, %v744
        %v761 = vmax.f32 %v729, %v745
        %v762 = vmax.f32 %v730, %v746
        %v763 = vmax.f32 %v731, %v747
        %v764 = vmax.f32 %v732, %v748
        %v765 = vmax.f32 %v733, %v749
        %v766 = vmax.f32 %v734, %v750
        %v767 = vmax.f32 %v735, %v751
        %v768 = vmax.f32 %v736, %v752
        %v769 = vmax.f32 %v737, %v753
        %v770 = vmax.f32 %v738, %v754
        %v771 = vmax.f32 %v739, %v755
        %v772 = vmax.f32 %v740, %v756
        %v773 = vmax.f32 %v741, %v757
        %v774 = vmax.f32 %v742, %v758
        %v775 = vmax.f32 %v743, %v759
        %v776 = vld [vmem:[#allocation2] sm:$0xff]
        %v777 = vld [vmem:[#allocation2 + $0x8] sm:$0xff]
        %v778 = vld [vmem:[#allocation2 + $0x10] sm:$0xff]
        %v779 = vld [vmem:[#allocation2 + $0x18] sm:$0xff]
        %v780 = vld [vmem:[#allocation2 + $0x20] sm:$0xff]
        %v781 = vld [vmem:[#allocation2 + $0x28] sm:$0xff]
        %v782 = vld [vmem:[#allocation2 + $0x30] sm:$0xff]
        %v783 = vld [vmem:[#allocation2 + $0x38] sm:$0xff]
        %v784 = vld [vmem:[#allocation2 + $0x40] sm:$0xff]
        %v785 = vld [vmem:[#allocation2 + $0x48] sm:$0xff]
        %v786 = vld [vmem:[#allocation2 + $0x50] sm:$0xff]
        %v787 = vld [vmem:[#allocation2 + $0x58] sm:$0xff]
        %v788 = vld [vmem:[#allocation2 + $0x60] sm:$0xff]
        %v789 = vld [vmem:[#allocation2 + $0x68] sm:$0xff]
        %v790 = vld [vmem:[#allocation2 + $0x70] sm:$0xff]
        %v791 = vld [vmem:[#allocation2 + $0x78] sm:$0xff]
        %v792 = vadd.f32 %v760, %v776
        %v793 = vadd.f32 %v761, %v777
        %v794 = vadd.f32 %v762, %v778
        %v795 = vadd.f32 %v763, %v779
        %v796 = vadd.f32 %v764, %v780
        %v797 = vadd.f32 %v765, %v781
        %v798 = vadd.f32 %v766, %v782
        %v799 = vadd.f32 %v767, %v783
        %v800 = vadd.f32 %v768, %v784
        %v801 = vadd.f32 %v769, %v785
        %v802 = vadd.f32 %v770, %v786
        %v803 = vadd.f32 %v771, %v787
        %v804 = vadd.f32 %v772, %v788
        %v805 = vadd.f32 %v773, %v789
        %v806 = vadd.f32 %v774, %v790
        %v807 = vadd.f32 %v775, %v791
        %808 = vmax.xlane.f32.xlu0 %v792
        %v809 = vpop.xlane.xlu0 %808
        %810 = vmax.xlane.f32.xlu0 %v793
        %v811 = vpop.xlane.xlu0 %810
        %812 = vmax.xlane.f32.xlu0 %v794
        %v813 = vpop.xlane.xlu0 %812
        %814 = vmax.xlane.f32.xlu0 %v795
        %v815 = vpop.xlane.xlu0 %814
        %816 = vmax.xlane.f32.xlu0 %v796
        %v817 = vpop.xlane.xlu0 %816
        %818 = vmax.xlane.f32.xlu0 %v797
        %v819 = vpop.xlane.xlu0 %818
        %820 = vmax.xlane.f32.xlu0 %v798
        %v821 = vpop.xlane.xlu0 %820
        %822 = vmax.xlane.f32.xlu0 %v799
        %v823 = vpop.xlane.xlu0 %822
        %824 = vmax.xlane.f32.xlu0 %v800
        %v825 = vpop.xlane.xlu0 %824
        %826 = vmax.xlane.f32.xlu0 %v801
        %v827 = vpop.xlane.xlu0 %826
        %828 = vmax.xlane.f32.xlu0 %v802
        %v829 = vpop.xlane.xlu0 %828
        %830 = vmax.xlane.f32.xlu0 %v803
        %v831 = vpop.xlane.xlu0 %830
        %832 = vmax.xlane.f32.xlu0 %v804
        %v833 = vpop.xlane.xlu0 %832
        %834 = vmax.xlane.f32.xlu0 %v805
        %v835 = vpop.xlane.xlu0 %834
        %836 = vmax.xlane.f32.xlu0 %v806
        %v837 = vpop.xlane.xlu0 %836
        %838 = vmax.xlane.f32.xlu0 %v807
        %v839 = vpop.xlane.xlu0 %838
        %v840 = vsub.f32 %v792, %v809
        %v841 = vsub.f32 %v793, %v811
        %v842 = vsub.f32 %v794, %v813
        %v843 = vsub.f32 %v795, %v815
        %v844 = vsub.f32 %v796, %v817
        %v845 = vsub.f32 %v797, %v819
        %v846 = vsub.f32 %v798, %v821
        %v847 = vsub.f32 %v799, %v823
        %v848 = vsub.f32 %v800, %v825
        %v849 = vsub.f32 %v801, %v827
        %v850 = vsub.f32 %v802, %v829
        %v851 = vsub.f32 %v803, %v831
        %v852 = vsub.f32 %v804, %v833
        %v853 = vsub.f32 %v805, %v835
        %v854 = vsub.f32 %v806, %v837
        %v855 = vsub.f32 %v807, %v839
        %v856 = vmul.f32 %v840, 1.442695
        %v857 = vpow.pop %v856
        %v858 = vmul.f32 %v841, 1.442695
        %v859 = vpow.pop %v858
        %v860 = vmul.f32 %v842, 1.442695
        %v861 = vpow.pop %v860
        %v862 = vmul.f32 %v843, 1.442695
        %v863 = vpow.pop %v862
        %v864 = vmul.f32 %v844, 1.442695
        %v865 = vpow.pop %v864
        %v866 = vmul.f32 %v845, 1.442695
        %v867 = vpow.pop %v866
        %v868 = vmul.f32 %v846, 1.442695
        %v869 = vpow.pop %v868
        %v870 = vmul.f32 %v847, 1.442695
        %v871 = vpow.pop %v870
        %v872 = vmul.f32 %v848, 1.442695
        %v873 = vpow.pop %v872
        %v874 = vmul.f32 %v849, 1.442695
        %v875 = vpow.pop %v874
        %v876 = vmul.f32 %v850, 1.442695
        %v877 = vpow.pop %v876
        %v878 = vmul.f32 %v851, 1.442695
        %v879 = vpow.pop %v878
        %v880 = vmul.f32 %v852, 1.442695
        %v881 = vpow.pop %v880
        %v882 = vmul.f32 %v853, 1.442695
        %v883 = vpow.pop %v882
        %v884 = vmul.f32 %v854, 1.442695
        %v885 = vpow.pop %v884
        %v886 = vmul.f32 %v855, 1.442695
        %v887 = vpow.pop %v886
        %888 = vadd.xlane.f32.xlu0 %v857
        %v889 = vpop.xlane.xlu0 %888
        %890 = vadd.xlane.f32.xlu0 %v859
        %v891 = vpop.xlane.xlu0 %890
        %892 = vadd.xlane.f32.xlu0 %v861
        %v893 = vpop.xlane.xlu0 %892
        %894 = vadd.xlane.f32.xlu0 %v863
        %v895 = vpop.xlane.xlu0 %894
        %896 = vadd.xlane.f32.xlu0 %v865
        %v897 = vpop.xlane.xlu0 %896
        %898 = vadd.xlane.f32.xlu0 %v867
        %v899 = vpop.xlane.xlu0 %898
        %900 = vadd.xlane.f32.xlu0 %v869
        %v901 = vpop.xlane.xlu0 %900
        %902 = vadd.xlane.f32.xlu0 %v871
        %v903 = vpop.xlane.xlu0 %902
        %904 = vadd.xlane.f32.xlu0 %v873
        %v905 = vpop.xlane.xlu0 %904
        %906 = vadd.xlane.f32.xlu0 %v875
        %v907 = vpop.xlane.xlu0 %906
        %908 = vadd.xlane.f32.xlu0 %v877
        %v909 = vpop.xlane.xlu0 %908
        %910 = vadd.xlane.f32.xlu0 %v879
        %v911 = vpop.xlane.xlu0 %910
        %912 = vadd.xlane.f32.xlu0 %v881
        %v913 = vpop.xlane.xlu0 %912
        %914 = vadd.xlane.f32.xlu0 %v883
        %v915 = vpop.xlane.xlu0 %914
        %916 = vadd.xlane.f32.xlu0 %v885
        %v917 = vpop.xlane.xlu0 %916
        %918 = vadd.xlane.f32.xlu0 %v887
        %v919 = vpop.xlane.xlu0 %918
        %v920 = vrcp.pop %v889
        %v921 = vmul.f32 %v889, %v920
        %v922 = vsub.f32 1.0, %v921
        %v923 = vmul.f32 %v920, %v922
        %v924 = vadd.f32 %v920, %v923
        %vm925 = vweird.f32 %v889
        %vm926 = vweird.f32 %v920
        %vm927 = vmor %vm925, %vm926
        %v928 = vsel %vm927, %v920, %v924
        %v929 = vand.u32 2147483647, %v889
        %vm930 = vcmp.eq.f32.partialorder %v929, 8.507059e+37
        %v931 = vand.u32 %v889, 2147483648
        %v932 = vor.u32 1.1754944e-38, %v931
        %v933 = vsel %vm930, %v932, %v928
        %v934 = vmul.f32 1.0, %v933
        %v935 = vrcp.pop %v891
        %v936 = vmul.f32 %v891, %v935
        %v937 = vsub.f32 1.0, %v936
        %v938 = vmul.f32 %v935, %v937
        %v939 = vadd.f32 %v935, %v938
        %vm940 = vweird.f32 %v891
        %vm941 = vweird.f32 %v935
        %vm942 = vmor %vm940, %vm941
        %v943 = vsel %vm942, %v935, %v939
        %v944 = vand.u32 2147483647, %v891
        %vm945 = vcmp.eq.f32.partialorder %v944, 8.507059e+37
        %v946 = vand.u32 %v891, 2147483648
        %v947 = vor.u32 1.1754944e-38, %v946
        %v948 = vsel %vm945, %v947, %v943
        %v949 = vmul.f32 1.0, %v948
        %v950 = vrcp.pop %v893
        %v951 = vmul.f32 %v893, %v950
        %v952 = vsub.f32 1.0, %v951
        %v953 = vmul.f32 %v950, %v952
        %v954 = vadd.f32 %v950, %v953
        %vm955 = vweird.f32 %v893
        %vm956 = vweird.f32 %v950
        %vm957 = vmor %vm955, %vm956
        %v958 = vsel %vm957, %v950, %v954
        %v959 = vand.u32 2147483647, %v893
        %vm960 = vcmp.eq.f32.partialorder %v959, 8.507059e+37
        %v961 = vand.u32 %v893, 2147483648
        %v962 = vor.u32 1.1754944e-38, %v961
        %v963 = vsel %vm960, %v962, %v958
        %v964 = vmul.f32 1.0, %v963
        %v965 = vrcp.pop %v895
        %v966 = vmul.f32 %v895, %v965
        %v967 = vsub.f32 1.0, %v966
        %v968 = vmul.f32 %v965, %v967
        %v969 = vadd.f32 %v965, %v968
        %vm970 = vweird.f32 %v895
        %vm971 = vweird.f32 %v965
        %vm972 = vmor %vm970, %vm971
        %v973 = vsel %vm972, %v965, %v969
        %v974 = vand.u32 2147483647, %v895
        %vm975 = vcmp.eq.f32.partialorder %v974, 8.507059e+37
        %v976 = vand.u32 %v895, 2147483648
        %v977 = vor.u32 1.1754944e-38, %v976
        %v978 = vsel %vm975, %v977, %v973
        %v979 = vmul.f32 1.0, %v978
        %v980 = vrcp.pop %v897
        %v981 = vmul.f32 %v897, %v980
        %v982 = vsub.f32 1.0, %v981
        %v983 = vmul.f32 %v980, %v982
        %v984 = vadd.f32 %v980, %v983
        %vm985 = vweird.f32 %v897
        %vm986 = vweird.f32 %v980
        %vm987 = vmor %vm985, %vm986
        %v988 = vsel %vm987, %v980, %v984
        %v989 = vand.u32 2147483647, %v897
        %vm990 = vcmp.eq.f32.partialorder %v989, 8.507059e+37
        %v991 = vand.u32 %v897, 2147483648
        %v992 = vor.u32 1.1754944e-38, %v991
        %v993 = vsel %vm990, %v992, %v988
        %v994 = vmul.f32 1.0, %v993
        %v995 = vrcp.pop %v899
        %v996 = vmul.f32 %v899, %v995
        %v997 = vsub.f32 1.0, %v996
        %v998 = vmul.f32 %v995, %v997
        %v999 = vadd.f32 %v995, %v998
        %vm1000 = vweird.f32 %v899
        %vm1001 = vweird.f32 %v995
        %vm1002 = vmor %vm1000, %vm1001
        %v1003 = vsel %vm1002, %v995, %v999
        %v1004 = vand.u32 2147483647, %v899
        %vm1005 = vcmp.eq.f32.partialorder %v1004, 8.507059e+37
        %v1006 = vand.u32 %v899, 2147483648
        %v1007 = vor.u32 1.1754944e-38, %v1006
        %v1008 = vsel %vm1005, %v1007, %v1003
        %v1009 = vmul.f32 1.0, %v1008
        %v1010 = vrcp.pop %v901
        %v1011 = vmul.f32 %v901, %v1010
        %v1012 = vsub.f32 1.0, %v1011
        %v1013 = vmul.f32 %v1010, %v1012
        %v1014 = vadd.f32 %v1010, %v1013
        %vm1015 = vweird.f32 %v901
        %vm1016 = vweird.f32 %v1010
        %vm1017 = vmor %vm1015, %vm1016
        %v1018 = vsel %vm1017, %v1010, %v1014
        %v1019 = vand.u32 2147483647, %v901
        %vm1020 = vcmp.eq.f32.partialorder %v1019, 8.507059e+37
        %v1021 = vand.u32 %v901, 2147483648
        %v1022 = vor.u32 1.1754944e-38, %v1021
        %v1023 = vsel %vm1020, %v1022, %v1018
        %v1024 = vmul.f32 1.0, %v1023
        %v1025 = vrcp.pop %v903
        %v1026 = vmul.f32 %v903, %v1025
        %v1027 = vsub.f32 1.0, %v1026
        %v1028 = vmul.f32 %v1025, %v1027
        %v1029 = vadd.f32 %v1025, %v1028
        %vm1030 = vweird.f32 %v903
        %vm1031 = vweird.f32 %v1025
        %vm1032 = vmor %vm1030, %vm1031
        %v1033 = vsel %vm1032, %v1025, %v1029
        %v1034 = vand.u32 2147483647, %v903
        %vm1035 = vcmp.eq.f32.partialorder %v1034, 8.507059e+37
        %v1036 = vand.u32 %v903, 2147483648
        %v1037 = vor.u32 1.1754944e-38, %v1036
        %v1038 = vsel %vm1035, %v1037, %v1033
        %v1039 = vmul.f32 1.0, %v1038
        %v1040 = vrcp.pop %v905
        %v1041 = vmul.f32 %v905, %v1040
        %v1042 = vsub.f32 1.0, %v1041
        %v1043 = vmul.f32 %v1040, %v1042
        %v1044 = vadd.f32 %v1040, %v1043
        %vm1045 = vweird.f32 %v905
        %vm1046 = vweird.f32 %v1040
        %vm1047 = vmor %vm1045, %vm1046
        %v1048 = vsel %vm1047, %v1040, %v1044
        %v1049 = vand.u32 2147483647, %v905
        %vm1050 = vcmp.eq.f32.partialorder %v1049, 8.507059e+37
        %v1051 = vand.u32 %v905, 2147483648
        %v1052 = vor.u32 1.1754944e-38, %v1051
        %v1053 = vsel %vm1050, %v1052, %v1048
        %v1054 = vmul.f32 1.0, %v1053
        %v1055 = vrcp.pop %v907
        %v1056 = vmul.f32 %v907, %v1055
        %v1057 = vsub.f32 1.0, %v1056
        %v1058 = vmul.f32 %v1055, %v1057
        %v1059 = vadd.f32 %v1055, %v1058
        %vm1060 = vweird.f32 %v907
        %vm1061 = vweird.f32 %v1055
        %vm1062 = vmor %vm1060, %vm1061
        %v1063 = vsel %vm1062, %v1055, %v1059
        %v1064 = vand.u32 2147483647, %v907
        %vm1065 = vcmp.eq.f32.partialorder %v1064, 8.507059e+37
        %v1066 = vand.u32 %v907, 2147483648
        %v1067 = vor.u32 1.1754944e-38, %v1066
        %v1068 = vsel %vm1065, %v1067, %v1063
        %v1069 = vmul.f32 1.0, %v1068
        %v1070 = vrcp.pop %v909
        %v1071 = vmul.f32 %v909, %v1070
        %v1072 = vsub.f32 1.0, %v1071
        %v1073 = vmul.f32 %v1070, %v1072
        %v1074 = vadd.f32 %v1070, %v1073
        %vm1075 = vweird.f32 %v909
        %vm1076 = vweird.f32 %v1070
        %vm1077 = vmor %vm1075, %vm1076
        %v1078 = vsel %vm1077, %v1070, %v1074
        %v1079 = vand.u32 2147483647, %v909
        %vm1080 = vcmp.eq.f32.partialorder %v1079, 8.507059e+37
        %v1081 = vand.u32 %v909, 2147483648
        %v1082 = vor.u32 1.1754944e-38, %v1081
        %v1083 = vsel %vm1080, %v1082, %v1078
        %v1084 = vmul.f32 1.0, %v1083
        %v1085 = vrcp.pop %v911
        %v1086 = vmul.f32 %v911, %v1085
        %v1087 = vsub.f32 1.0, %v1086
        %v1088 = vmul.f32 %v1085, %v1087
        %v1089 = vadd.f32 %v1085, %v1088
        %vm1090 = vweird.f32 %v911
        %vm1091 = vweird.f32 %v1085
        %vm1092 = vmor %vm1090, %vm1091
        %v1093 = vsel %vm1092, %v1085, %v1089
        %v1094 = vand.u32 2147483647, %v911
        %vm1095 = vcmp.eq.f32.partialorder %v1094, 8.507059e+37
        %v1096 = vand.u32 %v911, 2147483648
        %v1097 = vor.u32 1.1754944e-38, %v1096
        %v1098 = vsel %vm1095, %v1097, %v1093
        %v1099 = vmul.f32 1.0, %v1098
        %v1100 = vrcp.pop %v913
        %v1101 = vmul.f32 %v913, %v1100
        %v1102 = vsub.f32 1.0, %v1101
        %v1103 = vmul.f32 %v1100, %v1102
        %v1104 = vadd.f32 %v1100, %v1103
        %vm1105 = vweird.f32 %v913
        %vm1106 = vweird.f32 %v1100
        %vm1107 = vmor %vm1105, %vm1106
        %v1108 = vsel %vm1107, %v1100, %v1104
        %v1109 = vand.u32 2147483647, %v913
        %vm1110 = vcmp.eq.f32.partialorder %v1109, 8.507059e+37
        %v1111 = vand.u32 %v913, 2147483648
        %v1112 = vor.u32 1.1754944e-38, %v1111
        %v1113 = vsel %vm1110, %v1112, %v1108
        %v1114 = vmul.f32 1.0, %v1113
        %v1115 = vrcp.pop %v915
        %v1116 = vmul.f32 %v915, %v1115
        %v1117 = vsub.f32 1.0, %v1116
        %v1118 = vmul.f32 %v1115, %v1117
        %v1119 = vadd.f32 %v1115, %v1118
        %vm1120 = vweird.f32 %v915
        %vm1121 = vweird.f32 %v1115
        %vm1122 = vmor %vm1120, %vm1121
        %v1123 = vsel %vm1122, %v1115, %v1119
        %v1124 = vand.u32 2147483647, %v915
        %vm1125 = vcmp.eq.f32.partialorder %v1124, 8.507059e+37
        %v1126 = vand.u32 %v915, 2147483648
        %v1127 = vor.u32 1.1754944e-38, %v1126
        %v1128 = vsel %vm1125, %v1127, %v1123
        %v1129 = vmul.f32 1.0, %v1128
        %v1130 = vrcp.pop %v917
        %v1131 = vmul.f32 %v917, %v1130
        %v1132 = vsub.f32 1.0, %v1131
        %v1133 = vmul.f32 %v1130, %v1132
        %v1134 = vadd.f32 %v1130, %v1133
        %vm1135 = vweird.f32 %v917
        %vm1136 = vweird.f32 %v1130
        %vm1137 = vmor %vm1135, %vm1136
        %v1138 = vsel %vm1137, %v1130, %v1134
        %v1139 = vand.u32 2147483647, %v917
        %vm1140 = vcmp.eq.f32.partialorder %v1139, 8.507059e+37
        %v1141 = vand.u32 %v917, 2147483648
        %v1142 = vor.u32 1.1754944e-38, %v1141
        %v1143 = vsel %vm1140, %v1142, %v1138
        %v1144 = vmul.f32 1.0, %v1143
        %v1145 = vrcp.pop %v919
        %v1146 = vmul.f32 %v919, %v1145
        %v1147 = vsub.f32 1.0, %v1146
        %v1148 = vmul.f32 %v1145, %v1147
        %v1149 = vadd.f32 %v1145, %v1148
        %vm1150 = vweird.f32 %v919
        %vm1151 = vweird.f32 %v1145
        %vm1152 = vmor %vm1150, %vm1151
        %v1153 = vsel %vm1152, %v1145, %v1149
        %v1154 = vand.u32 2147483647, %v919
        %vm1155 = vcmp.eq.f32.partialorder %v1154, 8.507059e+37
        %v1156 = vand.u32 %v919, 2147483648
        %v1157 = vor.u32 1.1754944e-38, %v1156
        %v1158 = vsel %vm1155, %v1157, %v1153
        %v1159 = vmul.f32 1.0, %v1158
        %1160 = vmatpush.msra.mxu0 %v500
        %1161 = vmatpush.msra.mxu0 %v497
        %1162 = vmatpush.msra.mxu0 %v494
        %1163 = vmatpush.msra.mxu0 %v491
        %1164 = vmatpush.msra.mxu0 %v488
        %1165 = vmatpush.msra.mxu0 %v485
        %1166 = vmatpush.msra.mxu0 %v482
        %1167 = vmatpush.msra.mxu0 %v479
        %1168 = vmatpush.msra.mxu0 %v476
        %1169 = vmatpush.msra.mxu0 %v473
        %1170 = vmatpush.msra.mxu0 %v470
        %1171 = vmatpush.msra.mxu0 %v467
        %1172 = vmatpush.msra.mxu0 %v464
        %1173 = vmatpush.msra.mxu0 %v461
        %1174 = vmatpush.msra.mxu0 %v458
        %1175 = vmatpush.msra.mxu0 %v455
        %1176 = vmatmul.f32.gmra.mxu0 %v857
        %v1177 = vpop.f32.mrf.mxu0
        %v1178 = vadd.f32 0.0, %v1177
        %1179 = vmatmul.f32.gmra.mxu0 %v859
        %v1180 = vpop.f32.mrf.mxu0
        %v1181 = vadd.f32 0.0, %v1180
        %1182 = vmatmul.f32.gmra.mxu0 %v861
        %v1183 = vpop.f32.mrf.mxu0
        %v1184 = vadd.f32 0.0, %v1183
        %1185 = vmatmul.f32.gmra.mxu0 %v863
        %v1186 = vpop.f32.mrf.mxu0
        %v1187 = vadd.f32 0.0, %v1186
        %1188 = vmatmul.f32.gmra.mxu0 %v865
        %v1189 = vpop.f32.mrf.mxu0
        %v1190 = vadd.f32 0.0, %v1189
        %1191 = vmatmul.f32.gmra.mxu0 %v867
        %v1192 = vpop.f32.mrf.mxu0
        %v1193 = vadd.f32 0.0, %v1192
        %1194 = vmatmul.f32.gmra.mxu0 %v869
        %v1195 = vpop.f32.mrf.mxu0
        %v1196 = vadd.f32 0.0, %v1195
        %1197 = vmatmul.f32.gmra.mxu0 %v871
        %v1198 = vpop.f32.mrf.mxu0
        %v1199 = vadd.f32 0.0, %v1198
        %1200 = vmatmul.f32.gmra.mxu0 %v873
        %v1201 = vpop.f32.mrf.mxu0
        %v1202 = vadd.f32 0.0, %v1201
        %1203 = vmatmul.f32.gmra.mxu0 %v875
        %v1204 = vpop.f32.mrf.mxu0
        %v1205 = vadd.f32 0.0, %v1204
        %1206 = vmatmul.f32.gmra.mxu0 %v877
        %v1207 = vpop.f32.mrf.mxu0
        %v1208 = vadd.f32 0.0, %v1207
        %1209 = vmatmul.f32.gmra.mxu0 %v879
        %v1210 = vpop.f32.mrf.mxu0
        %v1211 = vadd.f32 0.0, %v1210
        %1212 = vmatmul.f32.gmra.mxu0 %v881
        %v1213 = vpop.f32.mrf.mxu0
        %v1214 = vadd.f32 0.0, %v1213
        %1215 = vmatmul.f32.gmra.mxu0 %v883
        %v1216 = vpop.f32.mrf.mxu0
        %v1217 = vadd.f32 0.0, %v1216
        %1218 = vmatmul.f32.gmra.mxu0 %v885
        %v1219 = vpop.f32.mrf.mxu0
        %v1220 = vadd.f32 0.0, %v1219
        %1221 = vmatmul.f32.gmra.mxu0 %v887
        %v1222 = vpop.f32.mrf.mxu0
        %v1223 = vadd.f32 0.0, %v1222
        %1224 = vdwg.mxu0
        %v1225 = vmul.f32 %v1178, %v934
        %v1226 = vmul.f32 %v1181, %v949
        %v1227 = vmul.f32 %v1184, %v964
        %v1228 = vmul.f32 %v1187, %v979
        %v1229 = vmul.f32 %v1190, %v994
        %v1230 = vmul.f32 %v1193, %v1009
        %v1231 = vmul.f32 %v1196, %v1024
        %v1232 = vmul.f32 %v1199, %v1039
        %v1233 = vmul.f32 %v1202, %v1054
        %v1234 = vmul.f32 %v1205, %v1069
        %v1235 = vmul.f32 %v1208, %v1084
        %v1236 = vmul.f32 %v1211, %v1099
        %v1237 = vmul.f32 %v1214, %v1114
        %v1238 = vmul.f32 %v1217, %v1129
        %v1239 = vmul.f32 %v1220, %v1144
        %v1240 = vmul.f32 %v1223, %v1159
        %v1241 = vld [vmem:[%s244] sm:$0x1]
        %v1243 = vperm.slane %v1241, 0
        %v1245 = vadd.f32 %v1225, %v1243
        %v1246 = vadd.f32 %v1226, %v1243
        %v1247 = vadd.f32 %v1227, %v1243
        %v1248 = vadd.f32 %v1228, %v1243
        %v1249 = vadd.f32 %v1229, %v1243
        %v1250 = vadd.f32 %v1230, %v1243
        %v1251 = vadd.f32 %v1231, %v1243
        %v1252 = vadd.f32 %v1232, %v1243
        %v1253 = vadd.f32 %v1233, %v1243
        %v1254 = vadd.f32 %v1234, %v1243
        %v1255 = vadd.f32 %v1235, %v1243
        %v1256 = vadd.f32 %v1236, %v1243
        %v1257 = vadd.f32 %v1237, %v1243
        %v1258 = vadd.f32 %v1238, %v1243
        %v1259 = vadd.f32 %v1239, %v1243
        %v1260 = vadd.f32 %v1240, %v1243
        %v1261 = vmul.f32 %v1245, 0.2
        %v1262 = vmul.f32 %v1246, 0.2
        %v1263 = vmul.f32 %v1247, 0.2
        %v1264 = vmul.f32 %v1248, 0.2
        %v1265 = vmul.f32 %v1249, 0.2
        %v1266 = vmul.f32 %v1250, 0.2
        %v1267 = vmul.f32 %v1251, 0.2
        %v1268 = vmul.f32 %v1252, 0.2
        %v1269 = vmul.f32 %v1253, 0.2
        %v1270 = vmul.f32 %v1254, 0.2
        %v1271 = vmul.f32 %v1255, 0.2
        %v1272 = vmul.f32 %v1256, 0.2
        %v1273 = vmul.f32 %v1257, 0.2
        %v1274 = vmul.f32 %v1258, 0.2
        %v1275 = vmul.f32 %v1259, 0.2
        %v1276 = vmul.f32 %v1260, 0.2
        %v1277 = vmax.f32 %v1245, %v1261
        %v1278 = vmax.f32 %v1246, %v1262
        %v1279 = vmax.f32 %v1247, %v1263
        %v1280 = vmax.f32 %v1248, %v1264
        %v1281 = vmax.f32 %v1249, %v1265
        %v1282 = vmax.f32 %v1250, %v1266
        %v1283 = vmax.f32 %v1251, %v1267
        %v1284 = vmax.f32 %v1252, %v1268
        %v1285 = vmax.f32 %v1253, %v1269
        %v1286 = vmax.f32 %v1254, %v1270
        %v1287 = vmax.f32 %v1255, %v1271
        %v1288 = vmax.f32 %v1256, %v1272
        %v1289 = vmax.f32 %v1257, %v1273
        %v1290 = vmax.f32 %v1258, %v1274
        %v1291 = vmax.f32 %v1259, %v1275
        %v1292 = vmax.f32 %v1260, %v1276
        %1293 = vst [vmem:[#allocation10] sm:$0xff] %v1277
        %1294 = vst [vmem:[#allocation10 + $0x8] sm:$0xff] %v1278
        %1295 = vst [vmem:[#allocation10 + $0x10] sm:$0xff] %v1279
        %1296 = vst [vmem:[#allocation10 + $0x18] sm:$0xff] %v1280
        %1297 = vst [vmem:[#allocation10 + $0x20] sm:$0xff] %v1281
        %1298 = vst [vmem:[#allocation10 + $0x28] sm:$0xff] %v1282
        %1299 = vst [vmem:[#allocation10 + $0x30] sm:$0xff] %v1283
        %1300 = vst [vmem:[#allocation10 + $0x38] sm:$0xff] %v1284
        %1301 = vst [vmem:[#allocation10 + $0x40] sm:$0xff] %v1285
        %1302 = vst [vmem:[#allocation10 + $0x48] sm:$0xff] %v1286
        %1303 = vst [vmem:[#allocation10 + $0x50] sm:$0xff] %v1287
        %1304 = vst [vmem:[#allocation10 + $0x58] sm:$0xff] %v1288
        %1305 = vst [vmem:[#allocation10 + $0x60] sm:$0xff] %v1289
        %1306 = vst [vmem:[#allocation10 + $0x68] sm:$0xff] %v1290
        %1307 = vst [vmem:[#allocation10 + $0x70] sm:$0xff] %v1291
        %1308 = vst [vmem:[#allocation10 + $0x78] sm:$0xff] %v1292
        // Predicated region
        $region57: #{tpu_custom_call.1} parent=35 // pred_check
          %p1309 = pneg %p125
        $region58: #{tpu_custom_call.1} parent=35 // pred_check_branch
          %1311 = sbr.rel (%p1309) target = $region60
        $region59: #{tpu_custom_call.1} parent=35 // pred_region
          %1313 = vsyncadd [#allocation5], 0
          %s1314 = sshll.u32 [#allocation10], 4
          %s1315 = int_to_ptr.vmem [resolvable:$true] %s1314
          %s1316 = sshll.u32 %s4, 4
          %s1317 = int_to_ptr.hbm [resolvable:$true] %s1316
          %1322 = dma.vmem_to_hbm [thread:$0]  %s1315, 2048, %s1317, [#allocation5], 128, 128, 8
        $region60: #{tpu_custom_call.1} parent=35 // pred_fallthru
          _
        // Predicated region
        $region61: #{tpu_custom_call.1} parent=35 // pred_check
          %p1323 = pneg %p125
        $region62: #{tpu_custom_call.1} parent=35 // pred_check_branch
          %1325 = sbr.rel (%p1323) target = $region64
        $region63: #{tpu_custom_call.1} parent=35 // pred_region
          %1327 = dma.done [#allocation5], 2048
        $region64: #{tpu_custom_call.1} parent=35 // pred_fallthru
          _
      $region36: #{tpu_custom_call.1} parent=5 // pred_fallthru
        _
      %p1328 = scmp.le.s32.totalorder 2, %s13
      // Predicated region
      $region65: #{tpu_custom_call.1} parent=5 // pred_check
        %p1329 = pneg %p1328
      $region66: #{tpu_custom_call.1} parent=5 // pred_check_branch
        %1331 = sbr.rel (%p1329) target = $region68
      $region67: #{tpu_custom_call.1} parent=5 // pred_region
        %s1332 = ssub.s32 %s13, 2
      $region68: #{tpu_custom_call.1} parent=5 // pred_fallthru
        _
    $region6: #{tpu_custom_call.1} parent=1 // loop_footer
      %s17 = sadd.s32 1, %s13
    $region7: #{tpu_custom_call.1} parent=1 // loop_footer_branch
      %12 = sbr.rel target = $region3
    $region8: #{tpu_custom_call.1} parent=1 // loop_exit
      _
    %1333 = vsyncpa [#allocation4], 1
    %s1334 = scalar_lea.sflag [#allocation4], 1
    %1335 = vsyncpa %s1334, 1
    %1336 = vsyncpa [#allocation7], 1
    %1337 = vsyncpa [#allocation5], 1
    %s1338 = scalar_lea.sflag [#allocation5], 1
    %1339 = vsyncpa %s1338, 1

</llo_original>
